<compile_context>
chip_gen: v7x
topology: tpu7x:2x2x1
jax: 0.10.0
libtpu: 0.0.40
codegen_flags: <defaults>
</compile_context>

<pallas_src>
import math
from functools import partial

import jax
import jax.numpy as jnp
from jax.experimental import pallas as pl
from jax.experimental.pallas import tpu as pltpu


def _add_coord_kernel(x_ref, o_ref, *, H, W, T):
    """x_ref: (TB, C, T) -> o_ref: (TB, C+2, T); T lanes of the flat H*W axis."""
    TB, C, _ = x_ref.shape

    # ---- concat, first operand: pass the input channels straight through ----
    o_ref[:, :C, :] = x_ref[...]

    # ---- concat, second operand: two normalized coordinate channels ---------
    # torch.linspace(-1, 1, n)[i] == -1 + i * 2/(n-1)   (== -1 for n == 1)
    step_h = 2.0 / (H - 1) if H > 1 else 0.0
    step_w = 2.0 / (W - 1) if W > 1 else 0.0

    off = pl.program_id(1) * T                   # flat-lane offset of this tile
    if T % 128 == 0:
        off = pl.multiple_of(off, 128)

    # Flat spatial index of each lane in this tile: k = i*W + j.
    k = jax.lax.broadcasted_iota(jnp.int32, (1, 1, T), 2) + off
    kf = k.astype(jnp.float32)                   # exact for k < 2^24
    wf = jnp.float32(W)
    ri = jnp.floor((kf + 0.5) * (1.0 / W))       # ~row index i
    ci = kf - ri * wf                            # ~col index j
    # +/-1 fixup for f32 rounding of the reciprocal multiply: the raw estimate
    # is never off by more than one row, so this makes the recovery exact.
    ri = ri + jnp.where(ci >= wf, 1.0, 0.0) - jnp.where(ci < 0.0, 1.0, 0.0)
    ci = kf - ri * wf

    # Merge the two coordinate channels into one (1, 2, T) store.
    coords = jnp.concatenate([ri * step_h - 1.0, ci * step_w - 1.0], axis=1)
    o_ref[:, C:, :] = jnp.broadcast_to(coords, (TB, 2, T)).astype(o_ref.dtype)


def _choose_tiles(B, C, HW, itemsize, budget_bytes=24 << 20, step_bytes=2 << 20):
    """Pick (TB, T) so the double-buffered in+out blocks stay under budget."""
    per_lane = (2 * C + 2) * itemsize            # in + out bytes per (batch, lane)
    max_lanes = max(budget_bytes // (2 * per_lane), 128)
    if HW <= max_lanes:
        # Full spatial extent per block; fold batch so each step moves >= ~2 MiB.
        T = HW
        fit = max(max_lanes // max(HW, 1), 1)
        want = -(-step_bytes // (per_lane * HW))          # ceil
        TB = max(1, min(B, fit, want))
    else:
        # Tile the flat spatial axis in multiples of 128 lanes.
        TB = 1
        T = max((min(max_lanes, 32768) // 128) * 128, 128)
    return TB, T


def add_coord(x, *, budget_bytes=24 << 20):
    """AddCoord.forward: x (..., C, H, W) -> (..., C+2, H, W)."""
    *lead, C, H, W = x.shape
    B = math.prod(lead) if lead else 1
    HW = H * W
    xf = x.reshape(B, C, HW)                     # free row-major collapse

    itemsize = jnp.dtype(x.dtype).itemsize
    TB, T = _choose_tiles(B, C, HW, itemsize, budget_bytes=budget_bytes)
    grid = (pl.cdiv(B, TB), pl.cdiv(HW, T))

    bytes_accessed = B * HW * (2 * C + 2) * itemsize
    out = pl.pallas_call(
        partial(_add_coord_kernel, H=H, W=W, T=T),
        out_shape=jax.ShapeDtypeStruct((B, C + 2, HW), x.dtype),
        grid=grid,
        in_specs=[pl.BlockSpec((TB, C, T), lambda b, t: (b, 0, t))],
        out_specs=pl.BlockSpec((TB, C + 2, T), lambda b, t: (b, 0, t)),
        compiler_params=pltpu.CompilerParams(
            dimension_semantics=("parallel", "parallel"),
            vmem_limit_bytes=48 << 20),
        cost_estimate=pl.CostEstimate(
            flops=8 * B * HW, transcendentals=0, bytes_accessed=bytes_accessed),
    )(xf)
    return out.reshape(*lead, C + 2, H, W)


# ------------------------------ pure-JAX reference -----------------------------

def _reference(x):
    *lead, C, H, W = x.shape
    lin_h = jnp.linspace(-1.0, 1.0, H, dtype=x.dtype)
    lin_w = jnp.linspace(-1.0, 1.0, W, dtype=x.dtype)
    rr, cc = jnp.meshgrid(lin_h, lin_w, indexing="ij")          # (H, W) each
    grid = jnp.stack([rr, cc], axis=0)                          # (2, H, W)
    grid = jnp.broadcast_to(grid, (*lead, 2, H, W))
    return jnp.concatenate([x, grid], axis=-3)


def _check(x, **kw):
    out = jax.block_until_ready(add_coord(x, **kw))
    ref = _reference(x)
    assert out.shape == ref.shape, (out.shape, ref.shape)
    max_err = float(jnp.max(jnp.abs(out - ref)))
    assert jnp.allclose(out, ref, atol=1e-5, rtol=1e-5), f"max_err={max_err}"


# ----------------------------------- main ---------------------------------------

if __name__ == "__main__":
    key = jax.random.PRNGKey(0)
    k0, k1, k2 = jax.random.split(key, 3)

    # Primary test shape (batch-folded, single-step fast path).
    x0 = jax.random.normal(k0, (2, 4, 16, 16), jnp.float32)
    _check(x0)

    # Force the spatial-tiling path (tiny VMEM budget -> T=128, partial last tile).
    x1 = jax.random.normal(k1, (1, 3, 8, 40), jnp.float32)
    _check(x1, budget_bytes=4096)

    # Arbitrary leading dims, non-128-multiple spatial extent.
    x2 = jax.random.normal(k2, (2, 3, 5, 4, 12), jnp.float32)
    _check(x2)

    print("KERNEL_OK")
</pallas_src>

<mosaic_0001>
module attributes {stable_mosaic.version = 11 : i64} {
  func.func @_add_coord_kernel(%arg0: i32, %arg1: i32, %arg2: memref<2x4x256xf32, #tpu.memory_space<vmem>>, %arg3: memref<2x6x256xf32, #tpu.memory_space<vmem>>) attributes {dimension_semantics = [#tpu.dimension_semantics<parallel>, #tpu.dimension_semantics<parallel>], iteration_bounds = array<i64: 1, 1>, scalar_prefetch = 0 : i64, scratch_operands = 0 : i64, tpu.core_type = #tpu.core_type<tc>, window_params = [{transform_indices = @transform_0, window_bounds = array<i64: 2, 4, 256>}, {transform_indices = @transform_1, window_bounds = array<i64: 2, 6, 256>}]} {
    %c0 = arith.constant 0 : index
    %c0_0 = arith.constant 0 : index
    %c0_1 = arith.constant 0 : index
    %0 = vector.load %arg2[%c0, %c0_0, %c0_1] : memref<2x4x256xf32, #tpu.memory_space<vmem>>, vector<2x4x256xf32>
    %c0_2 = arith.constant 0 : index
    %c0_3 = arith.constant 0 : index
    %c0_4 = arith.constant 0 : index
    %1 = vector.load %arg3[%c0_2, %c0_3, %c0_4] : memref<2x6x256xf32, #tpu.memory_space<vmem>>, vector<2x4x256xf32>
    tpu.vector_store %arg3[%c0_2, %c0_3, %c0_4], %0 {strides = array<i32>} : memref<2x6x256xf32, #tpu.memory_space<vmem>>, vector<2x4x256xf32>,
    %c256_i32 = arith.constant 256 : i32
    %2 = arith.muli %arg1, %c256_i32 : i32
    %3 = tpu.assume_multiple %2, 128 : i32
    %4 = tpu.iota {dimensions = array<i32: 2>} : vector<1x1x256xi32>
    %5 = vector.broadcast %3 : i32 to vector<1x1x256xi32>
    %6 = arith.addi %4, %5 : vector<1x1x256xi32>
    %7 = arith.sitofp %6 : vector<1x1x256xi32> to vector<1x1x256xf32>
    %cst = arith.constant 5.000000e-01 : f32
    %8 = vector.broadcast %cst : f32 to vector<1x1x256xf32>
    %9 = arith.addf %7, %8 : vector<1x1x256xf32>
    %cst_5 = arith.constant 6.250000e-02 : f32
    %10 = vector.broadcast %cst_5 : f32 to vector<1x1x256xf32>
    %11 = arith.mulf %9, %10 : vector<1x1x256xf32>
    %12 = math.floor %11 : vector<1x1x256xf32>
    %cst_6 = arith.constant 1.600000e+01 : f32
    %13 = vector.broadcast %cst_6 : f32 to vector<1x1x256xf32>
    %14 = arith.mulf %12, %13 : vector<1x1x256xf32>
    %15 = arith.subf %7, %14 : vector<1x1x256xf32>
    %cst_7 = arith.constant 1.600000e+01 : f32
    %16 = vector.broadcast %cst_7 : f32 to vector<1x1x256xf32>
    %17 = arith.cmpf oge, %15, %16 : vector<1x1x256xf32>
    %cst_8 = arith.constant 1.000000e+00 : f32
    %cst_9 = arith.constant 0.000000e+00 : f32
    %18 = vector.broadcast %cst_8 : f32 to vector<1x1x256xf32>
    %19 = vector.broadcast %cst_9 : f32 to vector<1x1x256xf32>
    %20 = arith.select %17, %18, %19 : vector<1x1x256xi1>, vector<1x1x256xf32>
    %21 = arith.addf %12, %20 : vector<1x1x256xf32>
    %cst_10 = arith.constant 0.000000e+00 : f32
    %22 = vector.broadcast %cst_10 : f32 to vector<1x1x256xf32>
    %23 = arith.cmpf olt, %15, %22 : vector<1x1x256xf32>
    %cst_11 = arith.constant 1.000000e+00 : f32
    %cst_12 = arith.constant 0.000000e+00 : f32
    %24 = vector.broadcast %cst_11 : f32 to vector<1x1x256xf32>
    %25 = vector.broadcast %cst_12 : f32 to vector<1x1x256xf32>
    %26 = arith.select %23, %24, %25 : vector<1x1x256xi1>, vector<1x1x256xf32>
    %27 = arith.subf %21, %26 : vector<1x1x256xf32>
    %cst_13 = arith.constant 1.600000e+01 : f32
    %28 = vector.broadcast %cst_13 : f32 to vector<1x1x256xf32>
    %29 = arith.mulf %27, %28 : vector<1x1x256xf32>
    %30 = arith.subf %7, %29 : vector<1x1x256xf32>
    %cst_14 = arith.constant 0.13333334 : f32
    %31 = vector.broadcast %cst_14 : f32 to vector<1x1x256xf32>
    %32 = arith.mulf %27, %31 : vector<1x1x256xf32>
    %cst_15 = arith.constant 1.000000e+00 : f32
    %33 = vector.broadcast %cst_15 : f32 to vector<1x1x256xf32>
    %34 = arith.subf %32, %33 : vector<1x1x256xf32>
    %cst_16 = arith.constant 0.13333334 : f32
    %35 = vector.broadcast %cst_16 : f32 to vector<1x1x256xf32>
    %36 = arith.mulf %30, %35 : vector<1x1x256xf32>
    %cst_17 = arith.constant 1.000000e+00 : f32
    %37 = vector.broadcast %cst_17 : f32 to vector<1x1x256xf32>
    %38 = arith.subf %36, %37 : vector<1x1x256xf32>
    %39 = tpu.concatenate %34, %38 in 1 : vector<1x1x256xf32>, vector<1x1x256xf32> -> vector<1x2x256xf32>
    %40 = vector.shape_cast %39 : vector<1x2x256xf32> to vector<1x2x256xf32>
    %41 = vector.broadcast %40 : vector<1x2x256xf32> to vector<2x2x256xf32>
    %c0_18 = arith.constant 0 : index
    %c4 = arith.constant 4 : index
    %c0_19 = arith.constant 0 : index
    %42 = vector.load %arg3[%c0_18, %c4, %c0_19] : memref<2x6x256xf32, #tpu.memory_space<vmem>>, vector<2x2x256xf32>
    tpu.vector_store %arg3[%c0_18, %c4, %c0_19], %41 {strides = array<i32>} : memref<2x6x256xf32, #tpu.memory_space<vmem>>, vector<2x2x256xf32>,
    return
  }
  func.func @transform_0(%arg0: i32, %arg1: i32) -> (i32, i32, i32) {
    %c0_i32 = arith.constant 0 : i32
    %c0_i32_0 = arith.constant 0 : i32
    return %arg0, %c0_i32, %arg1 : i32, i32, i32
  }
  func.func @transform_1(%arg0: i32, %arg1: i32) -> (i32, i32, i32) {
    %c0_i32 = arith.constant 0 : i32
    %c0_i32_0 = arith.constant 0 : i32
    return %arg0, %c0_i32, %arg1 : i32, i32, i32
  }
}

</mosaic_0001>

<llo_original>
// kernel: tpu_custom_call.1
$region0: #{tpu_custom_call.1}
  #allocation0 [shape = 'u32[]', space=smem, size = 0x4, offset = 0x4, fixed_abs, tag = 'smem constant byte address 0x4 - core index']
  #allocation1 [shape = 'u32[144,128]{1,0:T(1,128)}', space=vmem, size = 0x12000, scoped, tag = 'internal scratch']
  %s0 = inlined_call_operand.hbm [shape: f32[2,4,256], index: 0, kind: input, shape index: {}]
  %s1 = inlined_call_operand.vmem [shape: f32[2,6,256], index: 1, kind: output, shape index: {}]
  %s2 = sld [smem:[#allocation0]]
  $region18: #{tpu_custom_call.1} parent=0
    _
  %s4 = ssub.s32 1, %s2
  %s5 = scalar_select 0, %s4, %s2
  $region1: #{tpu_custom_call.1} parent=0
    #allocation2 [shape = 'u8[8192]{0}', space=vmem, size = 0x2000, scoped, tag = 'input window, operand 0, single buffered']
    #allocation3 [shape = 's32[1]{0}', space=sflag, size = 0x4, scoped, tag = 'scoped memory for tpu_custom_call.1']
    %6 = vsyncpa [#allocation3], 0
    // Predicated region
    $region2: #{tpu_custom_call.1} parent=1 // pred_check
      _
    $region3: #{tpu_custom_call.1} parent=1 // pred_check_branch
      %8 = sbr.rel (0) target = $region5
    $region4: #{tpu_custom_call.1} parent=1 // pred_region
      %s10 = ssub.s32 256, 256
      %11 = vsyncadd [#allocation3], %s10
      %s12 = sshll.u32 [#allocation2], 4
      %s13 = int_to_ptr.vmem [resolvable:$true] %s12
      %18 = dma.hbm_to_vmem [thread:$0]  %s0, 256, %s13, [#allocation3], 128, 128, 8
    $region5: #{tpu_custom_call.1} parent=1 // pred_fallthru
      _
    // Predicated region
    $region6: #{tpu_custom_call.1} parent=1 // pred_check
      _
    $region7: #{tpu_custom_call.1} parent=1 // pred_check_branch
      %20 = sbr.rel (0) target = $region9
    $region8: #{tpu_custom_call.1} parent=1 // pred_region
      %21 = dma.done [#allocation3], 256
    $region9: #{tpu_custom_call.1} parent=1 // pred_fallthru
      _
    %v22 = vld [vmem:[#allocation2] sm:$0xff]
    %v23 = vld [vmem:[#allocation2 + $0x8] sm:$0xff]
    %v26 = vcombine.high %v22, %v22
    %v27 = vcombine.high %v23, %v23
    %30 = vst [vmem:[%s1] sm:$0xf] %v22
    %31 = vst [vmem:[%s1 + $0x8] sm:$0xf] %v26
    %32 = vst [vmem:[%s1 + $0x10] sm:$0xf] %v23
    %33 = vst [vmem:[%s1 + $0x18] sm:$0xf] %v27
    %s34 = smul.u32 0, 256
    %v35 = vlaneseq
    %v36 = vand.u32 %v35, 127
    %v37 = vadd.s32 %v36, 128
    %v38 = vstv %s34
    %v39 = vadd.s32 %v36, %v38
    %v40 = vadd.s32 %v37, %v38
    %v41 = vcvt.s32.f32 %v39
    %v42 = vcvt.s32.f32 %v40
    %v43 = vadd.f32 %v41, 0.5
    %v44 = vadd.f32 %v42, 0.5
    %v45 = vmul.f32 %v43, 0.0625
    %v46 = vmul.f32 %v44, 0.0625
    %v47 = vfloor.f32 %v45
    %v48 = vfloor.f32 %v46
    %v49 = vmul.f32 %v47, 16.0
    %v50 = vmul.f32 %v48, 16.0
    %v51 = vsub.f32 %v41, %v49
    %v52 = vsub.f32 %v42, %v50
    %vm53 = vcmp.ge.f32.partialorder %v51, 16.0
    %vm54 = vcmp.ge.f32.partialorder %v52, 16.0
    %v55 = vsel %vm53, 1.0, 0.0
    %v56 = vsel %vm54, 1.0, 0.0
    %v57 = vadd.f32 %v47, %v55
    %v58 = vadd.f32 %v48, %v56
    %vm59 = vcmp.lt.f32.partialorder %v51, 0.0
    %vm60 = vcmp.lt.f32.partialorder %v52, 0.0
    %v61 = vsel %vm59, 1.0, 0.0
    %v62 = vsel %vm60, 1.0, 0.0
    %v63 = vsub.f32 %v57, %v61
    %v64 = vsub.f32 %v58, %v62
    %v65 = vmul.f32 %v63, 16.0
    %v66 = vmul.f32 %v64, 16.0
    %v67 = vsub.f32 %v41, %v65
    %v68 = vsub.f32 %v42, %v66
    %v69 = vmul.f32 %v63, 0.13333334
    %v70 = vmul.f32 %v64, 0.13333334
    %v71 = vsub.f32 %v69, 1.0
    %v72 = vsub.f32 %v70, 1.0
    %v73 = vmul.f32 %v67, 0.13333334
    %v74 = vmul.f32 %v68, 0.13333334
    %v75 = vsub.f32 %v73, 1.0
    %v76 = vsub.f32 %v74, 1.0
    %vm77 = vcmask 1040384
    %v78 = vsel %vm77, %v71, %v75
    %v79 = vsel %vm77, %v72, %v76
    %v82 = vrot.slane %v78, 4
    %v83 = vrot.slane %v79, 4
    %86 = vst [vmem:[%s1] sm:$0x30] %v82
    %87 = vst [vmem:[%s1 + $0x8] sm:$0x30] %v83
    %88 = vst [vmem:[%s1 + $0x10] sm:$0x30] %v82
    %89 = vst [vmem:[%s1 + $0x18] sm:$0x30] %v83
    // Predicated region
    $region10: #{tpu_custom_call.1} parent=1 // pred_check
      _
    $region11: #{tpu_custom_call.1} parent=1 // pred_check_branch
      %91 = sbr.rel (0) target = $region13
    $region12: #{tpu_custom_call.1} parent=1 // pred_region
      _
    $region13: #{tpu_custom_call.1} parent=1 // pred_fallthru
      _
    // Predicated region
    $region14: #{tpu_custom_call.1} parent=1 // pred_check
      _
    $region15: #{tpu_custom_call.1} parent=1 // pred_check_branch
      %93 = sbr.rel (0) target = $region17
    $region16: #{tpu_custom_call.1} parent=1 // pred_region
      _
    $region17: #{tpu_custom_call.1} parent=1 // pred_fallthru
      _
    %94 = vsyncpa [#allocation3], 1

</llo_original>
